<compile_context>
chip_gen: v7x
topology: tpu7x:2x2x1
jax: 0.10.0
libtpu: 0.0.40
codegen_flags: <defaults>
</compile_context>

<pallas_src>
import functools

import jax
import jax.numpy as jnp
from jax.experimental import pallas as pl
from jax.experimental.pallas import tpu as pltpu

INPUT_DIM = 28 * 28   # 784
HIDDEN_DIM = 100
OUTPUT_DIM = 10

HIDDEN_PAD = 128      # 100 -> 128 (lane-aligned)
OUTPUT_PAD = 128      # 10  -> 128 (lane-dense unmasked stores)


def mlp_kernel(x_ref,
               w1_ref, b1_ref,
               w2_ref, b2_ref,
               w3_ref, b3_ref,
               w4_ref, b4_ref,
               o_ref):
    # Fused forward pass for one batch tile.  f32 x tile is cast to bf16 here
    # (instead of in a separate wrapper pass); bf16 MXU matmuls accumulate in
    # f32; bias + ReLU epilogues stay in f32; final store is bf16.
    x = x_ref[...].astype(jnp.bfloat16)                               # [TB, 784]

    h = jnp.dot(x, w1_ref[...], preferred_element_type=jnp.float32) + b1_ref[...]
    h = jnp.maximum(h, 0.0).astype(jnp.bfloat16)

    h = jnp.dot(h, w2_ref[...], preferred_element_type=jnp.float32) + b2_ref[...]
    h = jnp.maximum(h, 0.0).astype(jnp.bfloat16)

    h = jnp.dot(h, w3_ref[...], preferred_element_type=jnp.float32) + b3_ref[...]
    h = jnp.maximum(h, 0.0).astype(jnp.bfloat16)

    out = jnp.dot(h, w4_ref[...], preferred_element_type=jnp.float32) + b4_ref[...]
    o_ref[...] = out.astype(o_ref.dtype)                              # bf16 [TB, 128]


def _pad_to(a, rows, cols):
    return jnp.pad(a, ((0, rows - a.shape[0]), (0, cols - a.shape[1])))


def _round_up(n, m):
    return ((n + m - 1) // m) * m


def _choose_batch_tile(B, tb):
    """Batch tile: multiple of 16 (bf16 sublane pack), <= tb, >= 2 grid steps when
    the batch is big enough (keeps both v7x TensorCores busy), small padding waste."""
    if B <= 16:
        return 16
    n_tiles = max((B + tb - 1) // tb, 2)
    return max(_round_up((B + n_tiles - 1) // n_tiles, 16), 16)


def prepare_params(params):
    """One-time lane padding + bf16 cast of the weights (biases stay f32).

    Hoisted out of the per-call path: padded columns carry exact zeros through
    bias+ReLU, and padded rows of downstream weights multiply zero activations,
    so the first OUTPUT_DIM output columns are unchanged.
    """
    return dict(
        w1=_pad_to(params["w1"], INPUT_DIM, HIDDEN_PAD).astype(jnp.bfloat16),
        w2=_pad_to(params["w2"], HIDDEN_PAD, HIDDEN_PAD).astype(jnp.bfloat16),
        w3=_pad_to(params["w3"], HIDDEN_PAD, HIDDEN_PAD).astype(jnp.bfloat16),
        w4=_pad_to(params["w4"], HIDDEN_PAD, OUTPUT_PAD).astype(jnp.bfloat16),
        b1=_pad_to(params["b1"], 1, HIDDEN_PAD).astype(jnp.float32),
        b2=_pad_to(params["b2"], 1, HIDDEN_PAD).astype(jnp.float32),
        b3=_pad_to(params["b3"], 1, HIDDEN_PAD).astype(jnp.float32),
        b4=_pad_to(params["b4"], 1, OUTPUT_PAD).astype(jnp.float32),
    )


@functools.partial(jax.jit, static_argnames=("tb",))
def feedforward_mlp(x, prepped, *, tb=512):
    """x: [B, 784] float32.  prepped: output of prepare_params()."""
    B = x.shape[0]
    TB = _choose_batch_tile(B, tb)
    n_tiles = (B + TB - 1) // TB
    B_pad = n_tiles * TB

    # x stays f32 (cast to bf16 per-tile inside the kernel); only pad rows if needed.
    xp = x if B_pad == B else jnp.pad(x, ((0, B_pad - B), (0, 0)))

    grid = (n_tiles,)

    # Batch-tiled x / out; weights & biases use a constant block index so they
    # are fetched once and stay VMEM-resident across grid steps.
    x_spec = pl.BlockSpec((TB, INPUT_DIM), lambda i: (i, 0))
    o_spec = pl.BlockSpec((TB, OUTPUT_PAD), lambda i: (i, 0))
    const = lambda shape: pl.BlockSpec(shape, lambda i: (0, 0))

    w = prepped
    flops = 2 * B_pad * (INPUT_DIM * HIDDEN_PAD
                         + 2 * HIDDEN_PAD * HIDDEN_PAD
                         + HIDDEN_PAD * OUTPUT_PAD)
    bytes_accessed = (xp.size * 4                                     # f32 x read
                      + (w["w1"].size + w["w2"].size
                         + w["w3"].size + w["w4"].size) * 2           # bf16 weights
                      + (w["b1"].size + w["b2"].size
                         + w["b3"].size + w["b4"].size) * 4           # f32 biases
                      + B_pad * OUTPUT_PAD * 2)                       # bf16 out write

    out = pl.pallas_call(
        mlp_kernel,
        out_shape=jax.ShapeDtypeStruct((B_pad, OUTPUT_PAD), jnp.bfloat16),
        grid=grid,
        in_specs=[
            x_spec,
            const(w["w1"].shape), const(w["b1"].shape),
            const(w["w2"].shape), const(w["b2"].shape),
            const(w["w3"].shape), const(w["b3"].shape),
            const(w["w4"].shape), const(w["b4"].shape),
        ],
        out_specs=o_spec,
        compiler_params=pltpu.CompilerParams(
            dimension_semantics=("parallel",)),
        cost_estimate=pl.CostEstimate(
            flops=flops, transcendentals=0, bytes_accessed=bytes_accessed),
    )(xp, w["w1"], w["b1"], w["w2"], w["b2"], w["w3"], w["b3"], w["w4"], w["b4"])

    # bf16 slice of the lane-padded output (half the writeback/read of the old f32
    # path).  Fuses into downstream consumers (argmax / cross-entropy) under jit.
    return out[:B, :OUTPUT_DIM]


def init_params(key):
    """Deterministic init matching nn.Linear's U(-1/sqrt(fan_in), 1/sqrt(fan_in))."""
    dims = [(INPUT_DIM, HIDDEN_DIM),
            (HIDDEN_DIM, HIDDEN_DIM),
            (HIDDEN_DIM, HIDDEN_DIM),
            (HIDDEN_DIM, OUTPUT_DIM)]
    params = {}
    for i, (fan_in, fan_out) in enumerate(dims, start=1):
        key, kw, kb = jax.random.split(key, 3)
        bound = 1.0 / jnp.sqrt(fan_in)
        params[f"w{i}"] = jax.random.uniform(
            kw, (fan_in, fan_out), jnp.float32, -bound, bound)
        params[f"b{i}"] = jax.random.uniform(
            kb, (1, fan_out), jnp.float32, -bound, bound)
    return params


def reference_mlp_bf16(x, params):
    """Reference mirroring the kernel's bf16-operand / f32-accumulate math."""
    def lin(h, w, b):
        return jnp.dot(h.astype(jnp.bfloat16), w.astype(jnp.bfloat16),
                       preferred_element_type=jnp.float32) + b
    h = jnp.maximum(lin(x, params["w1"], params["b1"]), 0.0)
    h = jnp.maximum(lin(h, params["w2"], params["b2"]), 0.0)
    h = jnp.maximum(lin(h, params["w3"], params["b3"]), 0.0)
    return lin(h, params["w4"], params["b4"])


def reference_mlp_f32(x, params):
    h = jnp.maximum(x @ params["w1"] + params["b1"], 0.0)
    h = jnp.maximum(h @ params["w2"] + params["b2"], 0.0)
    h = jnp.maximum(h @ params["w3"] + params["b3"], 0.0)
    return h @ params["w4"] + params["b4"]


def _check(x, params, prepped):
    out = jax.block_until_ready(feedforward_mlp(x, prepped))
    assert out.shape == (x.shape[0], OUTPUT_DIM)
    assert out.dtype == jnp.bfloat16
    out_f32 = out.astype(jnp.float32)

    ref_bf16 = reference_mlp_bf16(x, params)
    assert jnp.allclose(out_f32, ref_bf16, atol=2e-2, rtol=2e-2), \
        "mismatch vs bf16 JAX reference"
    # NOTE: bf16 operands + bf16 logits differ from a true f32 PyTorch model at
    # roughly the 1e-2 level; the f32 reference is checked loosely on purpose.
    ref_f32 = reference_mlp_f32(x, params)
    assert jnp.allclose(out_f32, ref_f32, atol=1e-1, rtol=1e-1), \
        "mismatch vs f32 JAX reference"


if __name__ == "__main__":
    key = jax.random.PRNGKey(0)
    key, kx1, kx2 = jax.random.split(key, 3)
    params = init_params(key)
    prepped = prepare_params(params)   # one-time weight padding / bf16 cast

    # Small demo batch of flattened 28x28 "MNIST" images (single-tile path).
    x_small = jax.random.normal(kx1, (8, INPUT_DIM), jnp.float32)
    _check(x_small, params, prepped)

    # Ragged batch exercising >1 grid step + batch padding (multi-tile path).
    x_multi = jax.random.normal(kx2, (40, INPUT_DIM), jnp.float32)
    _check(x_multi, params, prepped)

    print("KERNEL_OK")
</pallas_src>

<mosaic_0001>
module attributes {stable_mosaic.version = 11 : i64} {
  func.func @mlp_kernel(%arg0: i32, %arg1: memref<16x784xf32, #tpu.memory_space<vmem>>, %arg2: memref<784x128xbf16, #tpu.memory_space<vmem>>, %arg3: memref<1x128xf32, #tpu.memory_space<vmem>>, %arg4: memref<128x128xbf16, #tpu.memory_space<vmem>>, %arg5: memref<1x128xf32, #tpu.memory_space<vmem>>, %arg6: memref<128x128xbf16, #tpu.memory_space<vmem>>, %arg7: memref<1x128xf32, #tpu.memory_space<vmem>>, %arg8: memref<128x128xbf16, #tpu.memory_space<vmem>>, %arg9: memref<1x128xf32, #tpu.memory_space<vmem>>, %arg10: memref<16x128xbf16, #tpu.memory_space<vmem>>) attributes {dimension_semantics = [#tpu.dimension_semantics<parallel>], iteration_bounds = array<i64: 1>, scalar_prefetch = 0 : i64, scratch_operands = 0 : i64, tpu.core_type = #tpu.core_type<tc>, window_params = [{transform_indices = @transform_0, window_bounds = array<i64: 16, 784>}, {pipeline_mode = #tpu.pipeline_mode<synchronous>, transform_indices = @transform_1, window_bounds = array<i64: 784, 128>}, {pipeline_mode = #tpu.pipeline_mode<synchronous>, transform_indices = @transform_2, window_bounds = array<i64: 1, 128>}, {pipeline_mode = #tpu.pipeline_mode<synchronous>, transform_indices = @transform_3, window_bounds = array<i64: 128, 128>}, {pipeline_mode = #tpu.pipeline_mode<synchronous>, transform_indices = @transform_4, window_bounds = array<i64: 1, 128>}, {pipeline_mode = #tpu.pipeline_mode<synchronous>, transform_indices = @transform_5, window_bounds = array<i64: 128, 128>}, {pipeline_mode = #tpu.pipeline_mode<synchronous>, transform_indices = @transform_6, window_bounds = array<i64: 1, 128>}, {pipeline_mode = #tpu.pipeline_mode<synchronous>, transform_indices = @transform_7, window_bounds = array<i64: 128, 128>}, {pipeline_mode = #tpu.pipeline_mode<synchronous>, transform_indices = @transform_8, window_bounds = array<i64: 1, 128>}, {transform_indices = @transform_9, window_bounds = array<i64: 16, 128>}]} {
    %c0 = arith.constant 0 : index
    %c0_0 = arith.constant 0 : index
    %0 = vector.load %arg1[%c0, %c0_0] : memref<16x784xf32, #tpu.memory_space<vmem>>, vector<16x784xf32>
    %1 = arith.truncf %0 : vector<16x784xf32> to vector<16x784xbf16>
    %c0_1 = arith.constant 0 : index
    %c0_2 = arith.constant 0 : index
    %2 = vector.load %arg2[%c0_1, %c0_2] : memref<784x128xbf16, #tpu.memory_space<vmem>>, vector<784x128xbf16>
    %cst = arith.constant dense<0.000000e+00> : vector<16x128xf32>
    %3 = tpu.matmul %1, %2, %cst {dimension_numbers = #tpu.dot_dimension_numbers<[1], [0], [0], [1], [0, 0, 1, 1], [], []>} : vector<16x784xbf16>, vector<784x128xbf16>, vector<16x128xf32> -> vector<16x128xf32>
    %c0_3 = arith.constant 0 : index
    %c0_4 = arith.constant 0 : index
    %4 = vector.load %arg3[%c0_3, %c0_4] : memref<1x128xf32, #tpu.memory_space<vmem>>, vector<1x128xf32>
    %5 = vector.broadcast %4 : vector<1x128xf32> to vector<16x128xf32>
    %6 = arith.addf %3, %5 : vector<16x128xf32>
    %cst_5 = arith.constant 0.000000e+00 : f32
    %7 = vector.broadcast %cst_5 : f32 to vector<16x128xf32>
    %8 = arith.maximumf %6, %7 : vector<16x128xf32>
    %9 = arith.truncf %8 : vector<16x128xf32> to vector<16x128xbf16>
    %c0_6 = arith.constant 0 : index
    %c0_7 = arith.constant 0 : index
    %10 = vector.load %arg4[%c0_6, %c0_7] : memref<128x128xbf16, #tpu.memory_space<vmem>>, vector<128x128xbf16>
    %cst_8 = arith.constant dense<0.000000e+00> : vector<16x128xf32>
    %11 = tpu.matmul %9, %10, %cst_8 {dimension_numbers = #tpu.dot_dimension_numbers<[1], [0], [0], [1], [0, 0, 1, 1], [], []>} : vector<16x128xbf16>, vector<128x128xbf16>, vector<16x128xf32> -> vector<16x128xf32>
    %c0_9 = arith.constant 0 : index
    %c0_10 = arith.constant 0 : index
    %12 = vector.load %arg5[%c0_9, %c0_10] : memref<1x128xf32, #tpu.memory_space<vmem>>, vector<1x128xf32>
    %13 = vector.broadcast %12 : vector<1x128xf32> to vector<16x128xf32>
    %14 = arith.addf %11, %13 : vector<16x128xf32>
    %cst_11 = arith.constant 0.000000e+00 : f32
    %15 = vector.broadcast %cst_11 : f32 to vector<16x128xf32>
    %16 = arith.maximumf %14, %15 : vector<16x128xf32>
    %17 = arith.truncf %16 : vector<16x128xf32> to vector<16x128xbf16>
    %c0_12 = arith.constant 0 : index
    %c0_13 = arith.constant 0 : index
    %18 = vector.load %arg6[%c0_12, %c0_13] : memref<128x128xbf16, #tpu.memory_space<vmem>>, vector<128x128xbf16>
    %cst_14 = arith.constant dense<0.000000e+00> : vector<16x128xf32>
    %19 = tpu.matmul %17, %18, %cst_14 {dimension_numbers = #tpu.dot_dimension_numbers<[1], [0], [0], [1], [0, 0, 1, 1], [], []>} : vector<16x128xbf16>, vector<128x128xbf16>, vector<16x128xf32> -> vector<16x128xf32>
    %c0_15 = arith.constant 0 : index
    %c0_16 = arith.constant 0 : index
    %20 = vector.load %arg7[%c0_15, %c0_16] : memref<1x128xf32, #tpu.memory_space<vmem>>, vector<1x128xf32>
    %21 = vector.broadcast %20 : vector<1x128xf32> to vector<16x128xf32>
    %22 = arith.addf %19, %21 : vector<16x128xf32>
    %cst_17 = arith.constant 0.000000e+00 : f32
    %23 = vector.broadcast %cst_17 : f32 to vector<16x128xf32>
    %24 = arith.maximumf %22, %23 : vector<16x128xf32>
    %25 = arith.truncf %24 : vector<16x128xf32> to vector<16x128xbf16>
    %c0_18 = arith.constant 0 : index
    %c0_19 = arith.constant 0 : index
    %26 = vector.load %arg8[%c0_18, %c0_19] : memref<128x128xbf16, #tpu.memory_space<vmem>>, vector<128x128xbf16>
    %cst_20 = arith.constant dense<0.000000e+00> : vector<16x128xf32>
    %27 = tpu.matmul %25, %26, %cst_20 {dimension_numbers = #tpu.dot_dimension_numbers<[1], [0], [0], [1], [0, 0, 1, 1], [], []>} : vector<16x128xbf16>, vector<128x128xbf16>, vector<16x128xf32> -> vector<16x128xf32>
    %c0_21 = arith.constant 0 : index
    %c0_22 = arith.constant 0 : index
    %28 = vector.load %arg9[%c0_21, %c0_22] : memref<1x128xf32, #tpu.memory_space<vmem>>, vector<1x128xf32>
    %29 = vector.broadcast %28 : vector<1x128xf32> to vector<16x128xf32>
    %30 = arith.addf %27, %29 : vector<16x128xf32>
    %31 = arith.truncf %30 : vector<16x128xf32> to vector<16x128xbf16>
    %c0_23 = arith.constant 0 : index
    %c0_24 = arith.constant 0 : index
    %32 = vector.load %arg10[%c0_23, %c0_24] : memref<16x128xbf16, #tpu.memory_space<vmem>>, vector<16x128xbf16>
    tpu.vector_store %arg10[%c0_23, %c0_24], %31 {strides = array<i32>} : memref<16x128xbf16, #tpu.memory_space<vmem>>, vector<16x128xbf16>,
    return
  }
  func.func @transform_0(%arg0: i32) -> (i32, i32) {
    %c0_i32 = arith.constant 0 : i32
    %c0_i32_0 = arith.constant 0 : i32
    return %arg0, %c0_i32 : i32, i32
  }
  func.func @transform_1(%arg0: i32) -> (i32, i32) {
    %c0_i32 = arith.constant 0 : i32
    %c0_i32_0 = arith.constant 0 : i32
    %c0_i32_1 = arith.constant 0 : i32
    return %c0_i32, %c0_i32_0 : i32, i32
  }
  func.func @transform_2(%arg0: i32) -> (i32, i32) {
    %c0_i32 = arith.constant 0 : i32
    %c0_i32_0 = arith.constant 0 : i32
    %c0_i32_1 = arith.constant 0 : i32
    return %c0_i32, %c0_i32_0 : i32, i32
  }
  func.func @transform_3(%arg0: i32) -> (i32, i32) {
    %c0_i32 = arith.constant 0 : i32
    %c0_i32_0 = arith.constant 0 : i32
    %c0_i32_1 = arith.constant 0 : i32
    return %c0_i32, %c0_i32_0 : i32, i32
  }
  func.func @transform_4(%arg0: i32) -> (i32, i32) {
    %c0_i32 = arith.constant 0 : i32
    %c0_i32_0 = arith.constant 0 : i32
    %c0_i32_1 = arith.constant 0 : i32
    return %c0_i32, %c0_i32_0 : i32, i32
  }
  func.func @transform_5(%arg0: i32) -> (i32, i32) {
    %c0_i32 = arith.constant 0 : i32
    %c0_i32_0 = arith.constant 0 : i32
    %c0_i32_1 = arith.constant 0 : i32
    return %c0_i32, %c0_i32_0 : i32, i32
  }
  func.func @transform_6(%arg0: i32) -> (i32, i32) {
    %c0_i32 = arith.constant 0 : i32
    %c0_i32_0 = arith.constant 0 : i32
    %c0_i32_1 = arith.constant 0 : i32
    return %c0_i32, %c0_i32_0 : i32, i32
  }
  func.func @transform_7(%arg0: i32) -> (i32, i32) {
    %c0_i32 = arith.constant 0 : i32
    %c0_i32_0 = arith.constant 0 : i32
    %c0_i32_1 = arith.constant 0 : i32
    return %c0_i32, %c0_i32_0 : i32, i32
  }
  func.func @transform_8(%arg0: i32) -> (i32, i32) {
    %c0_i32 = arith.constant 0 : i32
    %c0_i32_0 = arith.constant 0 : i32
    %c0_i32_1 = arith.constant 0 : i32
    return %c0_i32, %c0_i32_0 : i32, i32
  }
  func.func @transform_9(%arg0: i32) -> (i32, i32) {
    %c0_i32 = arith.constant 0 : i32
    %c0_i32_0 = arith.constant 0 : i32
    return %arg0, %c0_i32 : i32, i32
  }
}

</mosaic_0001>

<llo_original>
// kernel: feedforward_mlp.1
$region0: #{feedforward_mlp.1}
  #allocation0 [shape = 'u32[]', space=smem, size = 0x4, offset = 0x4, fixed_abs, tag = 'smem constant byte address 0x4 - core index']
  #allocation1 [shape = 'u32[144,128]{1,0:T(1,128)}', space=vmem, size = 0x12000, scoped, tag = 'internal scratch']
  %s0 = inlined_call_operand.vmem [shape: f32[16,784], index: 0, kind: input, shape index: {}]
  %s1 = inlined_call_operand.hbm [shape: bf16[784,128], index: 1, kind: input, shape index: {}]
  %s2 = inlined_call_operand.vmem [shape: f32[1,128], index: 2, kind: input, shape index: {}]
  %s3 = inlined_call_operand.vmem [shape: bf16[128,128], index: 3, kind: input, shape index: {}]
  %s4 = inlined_call_operand.vmem [shape: f32[1,128], index: 4, kind: input, shape index: {}]
  %s5 = inlined_call_operand.vmem [shape: bf16[128,128], index: 5, kind: input, shape index: {}]
  %s6 = inlined_call_operand.vmem [shape: f32[1,128], index: 6, kind: input, shape index: {}]
  %s7 = inlined_call_operand.vmem [shape: bf16[128,128], index: 7, kind: input, shape index: {}]
  %s8 = inlined_call_operand.hbm [shape: f32[1,128], index: 8, kind: input, shape index: {}]
  %s9 = inlined_call_operand.vmem [shape: bf16[16,128], index: 9, kind: output, shape index: {}]
  %s10 = sld [smem:[#allocation0]]
  $region54: #{feedforward_mlp.1} parent=0
    _
  %s12 = ssub.s32 1, %s10
  %s13 = scalar_select 0, %s12, %s10
  $region1: #{feedforward_mlp.1} parent=0
    #allocation2 [shape = 'u8[200704]{0}', space=vmem, size = 0x31000, scoped, tag = 'input window, operand 1, single buffered']
    #allocation3 [shape = 's32[1]{0}', space=sflag, size = 0x4, scoped, tag = 'scoped memory for feedforward_mlp.1']
    #allocation4 [shape = 'u8[512]{0}', space=vmem, size = 0x400, scoped, tag = 'input window, operand 8, single buffered']
    #allocation5 [shape = 's32[1]{0}', space=sflag, size = 0x4, scoped, tag = 'scoped memory for feedforward_mlp.1']
    %14 = vsyncpa [#allocation3], 0
    %15 = vsyncpa [#allocation5], 0
    // Predicated region
    $region2: #{feedforward_mlp.1} parent=1 // pred_check
      _
    $region3: #{feedforward_mlp.1} parent=1 // pred_check_branch
      %17 = sbr.rel (0) target = $region5
    $region4: #{feedforward_mlp.1} parent=1 // pred_region
      _
    $region5: #{feedforward_mlp.1} parent=1 // pred_fallthru
      _
    // Predicated region
    $region6: #{feedforward_mlp.1} parent=1 // pred_check
      _
    $region7: #{feedforward_mlp.1} parent=1 // pred_check_branch
      %19 = sbr.rel (0) target = $region9
    $region8: #{feedforward_mlp.1} parent=1 // pred_region
      %s21 = ssub.s32 6272, 6272
      %22 = vsyncadd [#allocation3], %s21
      %s23 = sshll.u32 [#allocation2], 4
      %s24 = int_to_ptr.vmem [resolvable:$true] %s23
      %29 = dma.hbm_to_vmem [thread:$0]  %s1, 6272, %s24, [#allocation3], 64, 64, 4
    $region9: #{feedforward_mlp.1} parent=1 // pred_fallthru
      _
    // Predicated region
    $region10: #{feedforward_mlp.1} parent=1 // pred_check
      _
    $region11: #{feedforward_mlp.1} parent=1 // pred_check_branch
      %31 = sbr.rel (0) target = $region13
    $region12: #{feedforward_mlp.1} parent=1 // pred_region
      _
    $region13: #{feedforward_mlp.1} parent=1 // pred_fallthru
      _
    // Predicated region
    $region14: #{feedforward_mlp.1} parent=1 // pred_check
      _
    $region15: #{feedforward_mlp.1} parent=1 // pred_check_branch
      %33 = sbr.rel (0) target = $region17
    $region16: #{feedforward_mlp.1} parent=1 // pred_region
      _
    $region17: #{feedforward_mlp.1} parent=1 // pred_fallthru
      _
    // Predicated region
    $region18: #{feedforward_mlp.1} parent=1 // pred_check
      _
    $region19: #{feedforward_mlp.1} parent=1 // pred_check_branch
      %35 = sbr.rel (0) target = $region21
    $region20: #{feedforward_mlp.1} parent=1 // pred_region
      _
    $region21: #{feedforward_mlp.1} parent=1 // pred_fallthru
      _
    // Predicated region
    $region22: #{feedforward_mlp.1} parent=1 // pred_check
      _
    $region23: #{feedforward_mlp.1} parent=1 // pred_check_branch
      %37 = sbr.rel (0) target = $region25
    $region24: #{feedforward_mlp.1} parent=1 // pred_region
      _
    $region25: #{feedforward_mlp.1} parent=1 // pred_fallthru
      _
    // Predicated region
    $region26: #{feedforward_mlp.1} parent=1 // pred_check
      _
    $region27: #{feedforward_mlp.1} parent=1 // pred_check_branch
      %39 = sbr.rel (0) target = $region29
    $region28: #{feedforward_mlp.1} parent=1 // pred_region
      _
    $region29: #{feedforward_mlp.1} parent=1 // pred_fallthru
      _
    // Predicated region
    $region30: #{feedforward_mlp.1} parent=1 // pred_check
      _
    $region31: #{feedforward_mlp.1} parent=1 // pred_check_branch
      %41 = sbr.rel (0) target = $region33
    $region32: #{feedforward_mlp.1} parent=1 // pred_region
      _
    $region33: #{feedforward_mlp.1} parent=1 // pred_fallthru
      _
    // Predicated region
    $region34: #{feedforward_mlp.1} parent=1 // pred_check
      _
    $region35: #{feedforward_mlp.1} parent=1 // pred_check_branch
      %43 = sbr.rel (0) target = $region37
    $region36: #{feedforward_mlp.1} parent=1 // pred_region
      %s45 = ssub.s32 16, 16
      %46 = vsyncadd [#allocation5], %s45
      %s48 = sshll.u32 [#allocation4], 4
      %s49 = int_to_ptr.vmem [resolvable:$true] %s48
      %51 = dma.hbm_to_vmem [thread:$0]  %s8, 16, %s49, [#allocation5]
    $region37: #{feedforward_mlp.1} parent=1 // pred_fallthru
      _
    // Predicated region
    $region38: #{feedforward_mlp.1} parent=1 // pred_check
      _
    $region39: #{feedforward_mlp.1} parent=1 // pred_check_branch
      %53 = sbr.rel (0) target = $region41
    $region40: #{feedforward_mlp.1} parent=1 // pred_region
      %54 = dma.done [#allocation3], 6272
    $region41: #{feedforward_mlp.1} parent=1 // pred_fallthru
      _
    // Predicated region
    $region42: #{feedforward_mlp.1} parent=1 // pred_check
      _
    $region43: #{feedforward_mlp.1} parent=1 // pred_check_branch
      %56 = sbr.rel (0) target = $region45
    $region44: #{feedforward_mlp.1} parent=1 // pred_region
      %57 = dma.done [#allocation5], 16
    $region45: #{feedforward_mlp.1} parent=1 // pred_fallthru
      _
    %v59 = vld [vmem:[%s0] sm:$0xff]
    %v60 = vld [vmem:[%s0 + $0x8] sm:$0xff]
    %v61 = vld [vmem:[%s0 + $0x10] sm:$0xff]
    %v62 = vld [vmem:[%s0 + $0x18] sm:$0xff]
    %v63 = vld [vmem:[%s0 + $0x20] sm:$0xff]
    %v64 = vld [vmem:[%s0 + $0x28] sm:$0xff]
    %v65 = vld [vmem:[%s0 + $0x30] sm:$0xff]
    %v66 = vld [vmem:[%s0 + $0x38] sm:$0xff]
    %v67 = vld [vmem:[%s0 + $0x40] sm:$0xff]
    %v68 = vld [vmem:[%s0 + $0x48] sm:$0xff]
    %v69 = vld [vmem:[%s0 + $0x50] sm:$0xff]
    %v70 = vld [vmem:[%s0 + $0x58] sm:$0xff]
    %v71 = vld [vmem:[%s0 + $0x60] sm:$0xff]
    %v72 = vld [vmem:[%s0 + $0x68] sm:$0xff]
    %v73 = vpack.c.bf16 %v66, %v59
    %v74 = vpack.c.bf16 %v67, %v60
    %v75 = vpack.c.bf16 %v68, %v61
    %v76 = vpack.c.bf16 %v69, %v62
    %v77 = vpack.c.bf16 %v70, %v63
    %v78 = vpack.c.bf16 %v71, %v64
    %v79 = vpack.c.bf16 %v72, %v65
    %v80 = vld [vmem:[#allocation2] sm:$0xf]
    %v81 = vld [vmem:[#allocation2 + $0x4] sm:$0xf]
    %v82 = vld [vmem:[#allocation2 + $0x8] sm:$0xf]
    %v83 = vld [vmem:[#allocation2 + $0xc] sm:$0xf]
    %v84 = vld [vmem:[#allocation2 + $0x10] sm:$0xf]
    %v85 = vld [vmem:[#allocation2 + $0x14] sm:$0xf]
    %v86 = vld [vmem:[#allocation2 + $0x18] sm:$0xf]
    %v87 = vld [vmem:[#allocation2 + $0x1c] sm:$0xf]
    %v88 = vld [vmem:[#allocation2 + $0x20] sm:$0xf]
    %v89 = vld [vmem:[#allocation2 + $0x24] sm:$0xf]
    %v90 = vld [vmem:[#allocation2 + $0x28] sm:$0xf]
    %v91 = vld [vmem:[#allocation2 + $0x2c] sm:$0xf]
    %v92 = vld [vmem:[#allocation2 + $0x30] sm:$0xf]
    %v93 = vld [vmem:[#allocation2 + $0x34] sm:$0xf]
    %v94 = vld [vmem:[#allocation2 + $0x38] sm:$0xf]
    %v95 = vld [vmem:[#allocation2 + $0x3c] sm:$0xf]
    %v96 = vld [vmem:[#allocation2 + $0x40] sm:$0xf]
    %v97 = vld [vmem:[#allocation2 + $0x44] sm:$0xf]
    %v98 = vld [vmem:[#allocation2 + $0x48] sm:$0xf]
    %v99 = vld [vmem:[#allocation2 + $0x4c] sm:$0xf]
    %v100 = vld [vmem:[#allocation2 + $0x50] sm:$0xf]
    %v101 = vld [vmem:[#allocation2 + $0x54] sm:$0xf]
    %v102 = vld [vmem:[#allocation2 + $0x58] sm:$0xf]
    %v103 = vld [vmem:[#allocation2 + $0x5c] sm:$0xf]
    %v104 = vld [vmem:[#allocation2 + $0x60] sm:$0xf]
    %v105 = vld [vmem:[#allocation2 + $0x64] sm:$0xf]
    %v106 = vld [vmem:[#allocation2 + $0x68] sm:$0xf]
    %v107 = vld [vmem:[#allocation2 + $0x6c] sm:$0xf]
    %v108 = vld [vmem:[#allocation2 + $0x70] sm:$0xf]
    %v109 = vld [vmem:[#allocation2 + $0x74] sm:$0xf]
    %v110 = vld [vmem:[#allocation2 + $0x78] sm:$0xf]
    %v111 = vld [vmem:[#allocation2 + $0x7c] sm:$0xf]
    %v112 = vld [vmem:[#allocation2 + $0x80] sm:$0xf]
    %v113 = vld [vmem:[#allocation2 + $0x84] sm:$0xf]
    %v114 = vld [vmem:[#allocation2 + $0x88] sm:$0xf]
    %v115 = vld [vmem:[#allocation2 + $0x8c] sm:$0xf]
    %v116 = vld [vmem:[#allocation2 + $0x90] sm:$0xf]
    %v117 = vld [vmem:[#allocation2 + $0x94] sm:$0xf]
    %v118 = vld [vmem:[#allocation2 + $0x98] sm:$0xf]
    %v119 = vld [vmem:[#allocation2 + $0x9c] sm:$0xf]
    %v120 = vld [vmem:[#allocation2 + $0xa0] sm:$0xf]
    %v121 = vld [vmem:[#allocation2 + $0xa4] sm:$0xf]
    %v122 = vld [vmem:[#allocation2 + $0xa8] sm:$0xf]
    %v123 = vld [vmem:[#allocation2 + $0xac] sm:$0xf]
    %v124 = vld [vmem:[#allocation2 + $0xb0] sm:$0xf]
    %v125 = vld [vmem:[#allocation2 + $0xb4] sm:$0xf]
    %v126 = vld [vmem:[#allocation2 + $0xb8] sm:$0xf]
    %v127 = vld [vmem:[#allocation2 + $0xbc] sm:$0xf]
    %v128 = vld [vmem:[#allocation2 + $0xc0] sm:$0xf]
    %v129 = vld [vmem:[#allocation2 + $0xc4] sm:$0xf]
    %v130 = vld [vmem:[#allocation2 + $0xc8] sm:$0xf]
    %v131 = vld [vmem:[#allocation2 + $0xcc] sm:$0xf]
    %v132 = vld [vmem:[#allocation2 + $0xd0] sm:$0xf]
    %v133 = vld [vmem:[#allocation2 + $0xd4] sm:$0xf]
    %v134 = vld [vmem:[#allocation2 + $0xd8] sm:$0xf]
    %v135 = vld [vmem:[#allocation2 + $0xdc] sm:$0xf]
    %v136 = vld [vmem:[#allocation2 + $0xe0] sm:$0xf]
    %v137 = vld [vmem:[#allocation2 + $0xe4] sm:$0xf]
    %v138 = vld [vmem:[#allocation2 + $0xe8] sm:$0xf]
    %v139 = vld [vmem:[#allocation2 + $0xec] sm:$0xf]
    %v140 = vld [vmem:[#allocation2 + $0xf0] sm:$0xf]
    %v141 = vld [vmem:[#allocation2 + $0xf4] sm:$0xf]
    %v142 = vld [vmem:[#allocation2 + $0xf8] sm:$0xf]
    %v143 = vld [vmem:[#allocation2 + $0xfc] sm:$0xf]
    %v144 = vld [vmem:[#allocation2 + $0x100] sm:$0xf]
    %v145 = vld [vmem:[#allocation2 + $0x104] sm:$0xf]
    %v146 = vld [vmem:[#allocation2 + $0x108] sm:$0xf]
    %v147 = vld [vmem:[#allocation2 + $0x10c] sm:$0xf]
    %v148 = vld [vmem:[#allocation2 + $0x110] sm:$0xf]
    %v149 = vld [vmem:[#allocation2 + $0x114] sm:$0xf]
    %v150 = vld [vmem:[#allocation2 + $0x118] sm:$0xf]
    %v151 = vld [vmem:[#allocation2 + $0x11c] sm:$0xf]
    %v152 = vld [vmem:[#allocation2 + $0x120] sm:$0xf]
    %v153 = vld [vmem:[#allocation2 + $0x124] sm:$0xf]
    %v154 = vld [vmem:[#allocation2 + $0x128] sm:$0xf]
    %v155 = vld [vmem:[#allocation2 + $0x12c] sm:$0xf]
    %v156 = vld [vmem:[#allocation2 + $0x130] sm:$0xf]
    %v157 = vld [vmem:[#allocation2 + $0x134] sm:$0xf]
    %v158 = vld [vmem:[#allocation2 + $0x138] sm:$0xf]
    %v159 = vld [vmem:[#allocation2 + $0x13c] sm:$0xf]
    %v160 = vld [vmem:[#allocation2 + $0x140] sm:$0xf]
    %v161 = vld [vmem:[#allocation2 + $0x144] sm:$0xf]
    %v162 = vld [vmem:[#allocation2 + $0x148] sm:$0xf]
    %v163 = vld [vmem:[#allocation2 + $0x14c] sm:$0xf]
    %v164 = vld [vmem:[#allocation2 + $0x150] sm:$0xf]
    %v165 = vld [vmem:[#allocation2 + $0x154] sm:$0xf]
    %v166 = vld [vmem:[#allocation2 + $0x158] sm:$0xf]
    %v167 = vld [vmem:[#allocation2 + $0x15c] sm:$0xf]
    %v168 = vld [vmem:[#allocation2 + $0x160] sm:$0xf]
    %v169 = vld [vmem:[#allocation2 + $0x164] sm:$0xf]
    %v170 = vld [vmem:[#allocation2 + $0x168] sm:$0xf]
    %v171 = vld [vmem:[#allocation2 + $0x16c] sm:$0xf]
    %v172 = vld [vmem:[#allocation2 + $0x170] sm:$0xf]
    %v173 = vld [vmem:[#allocation2 + $0x174] sm:$0xf]
    %v174 = vld [vmem:[#allocation2 + $0x178] sm:$0xf]
    %v175 = vld [vmem:[#allocation2 + $0x17c] sm:$0xf]
    %v176 = vld [vmem:[#allocation2 + $0x180] sm:$0xf]
    %v177 = vld [vmem:[#allocation2 + $0x184] sm:$0xf]
    %v178 = vld [vmem:[%s2] sm:$0x1]
    %v180 = vlaneseq
    %v181 = vshrl.u32 %v180, 7
    %v182 = vsub.s32 0, %v181
    %v183 = vrot.slane %v178, %v182
    %v283 = vunpack.c.l.b16 %v80
    %v284 = vunpack.c.l.b16 %v81
    %v285 = vunpack.c.l.b16 %v82
    %v286 = vunpack.c.l.b16 %v83
    %v287 = vunpack.c.l.b16 %v84
    %v288 = vunpack.c.l.b16 %v85
    %v289 = vunpack.c.l.b16 %v86
    %v290 = vunpack.c.l.b16 %v87
    %v291 = vunpack.c.l.b16 %v88
    %v292 = vunpack.c.l.b16 %v89
    %v293 = vunpack.c.l.b16 %v90
    %v294 = vunpack.c.l.b16 %v91
    %v295 = vunpack.c.l.b16 %v92
    %v296 = vunpack.c.l.b16 %v93
    %v297 = vunpack.c.l.b16 %v94
    %v298 = vunpack.c.l.b16 %v95
    %v299 = vunpack.c.l.b16 %v96
    %v300 = vunpack.c.l.b16 %v97
    %v301 = vunpack.c.l.b16 %v98
    %v302 = vunpack.c.l.b16 %v99
    %v303 = vunpack.c.l.b16 %v100
    %v304 = vunpack.c.l.b16 %v101
    %v305 = vunpack.c.l.b16 %v102
    %v306 = vunpack.c.l.b16 %v103
    %v307 = vunpack.c.l.b16 %v104
    %v308 = vunpack.c.l.b16 %v105
    %v309 = vunpack.c.l.b16 %v106
    %v310 = vunpack.c.l.b16 %v107
    %v311 = vunpack.c.l.b16 %v108
    %v312 = vunpack.c.l.b16 %v109
    %v313 = vunpack.c.l.b16 %v110
    %v314 = vunpack.c.l.b16 %v111
    %v315 = vunpack.c.l.b16 %v112
    %v316 = vunpack.c.l.b16 %v113
    %v317 = vunpack.c.l.b16 %v114
    %v318 = vunpack.c.l.b16 %v115
    %v319 = vunpack.c.l.b16 %v116
    %v320 = vunpack.c.l.b16 %v117
    %v321 = vunpack.c.l.b16 %v118
    %v322 = vunpack.c.l.b16 %v119
    %v323 = vunpack.c.l.b16 %v120
    %v324 = vunpack.c.l.b16 %v121
    %v325 = vunpack.c.l.b16 %v122
    %v326 = vunpack.c.l.b16 %v123
    %v327 = vunpack.c.l.b16 %v124
    %v328 = vunpack.c.l.b16 %v125
    %v329 = vunpack.c.l.b16 %v126
    %v330 = vunpack.c.l.b16 %v127
    %v331 = vunpack.c.l.b16 %v128
    %v332 = vunpack.c.l.b16 %v129
    %v333 = vunpack.c.l.b16 %v130
    %v334 = vunpack.c.l.b16 %v131
    %v335 = vunpack.c.l.b16 %v132
    %v336 = vunpack.c.l.b16 %v133
    %v337 = vunpack.c.l.b16 %v134
    %v338 = vunpack.c.l.b16 %v135
    %v339 = vunpack.c.l.b16 %v136
    %v340 = vunpack.c.l.b16 %v137
    %v341 = vunpack.c.l.b16 %v138
    %v342 = vunpack.c.l.b16 %v139
    %v343 = vunpack.c.l.b16 %v140
    %v344 = vunpack.c.l.b16 %v141
    %v345 = vunpack.c.l.b16 %v142
    %v346 = vunpack.c.l.b16 %v143
    %v347 = vunpack.c.l.b16 %v144
    %v348 = vunpack.c.l.b16 %v145
    %v349 = vunpack.c.l.b16 %v146
    %v350 = vunpack.c.l.b16 %v147
    %v351 = vunpack.c.l.b16 %v148
    %v352 = vunpack.c.l.b16 %v149
    %v353 = vunpack.c.l.b16 %v150
    %v354 = vunpack.c.l.b16 %v151
    %v355 = vunpack.c.l.b16 %v152
    %v356 = vunpack.c.l.b16 %v153
    %v357 = vunpack.c.l.b16 %v154
    %v358 = vunpack.c.l.b16 %v155
    %v359 = vunpack.c.l.b16 %v156
    %v360 = vunpack.c.l.b16 %v157
    %v361 = vunpack.c.l.b16 %v158
    %v362 = vunpack.c.l.b16 %v159
    %v363 = vunpack.c.l.b16 %v160
    %v364 = vunpack.c.l.b16 %v161
    %v365 = vunpack.c.l.b16 %v162
    %v366 = vunpack.c.l.b16 %v163
    %v367 = vunpack.c.l.b16 %v164
    %v368 = vunpack.c.l.b16 %v165
    %v369 = vunpack.c.l.b16 %v166
    %v370 = vunpack.c.l.b16 %v167
    %v371 = vunpack.c.l.b16 %v168
    %v372 = vunpack.c.l.b16 %v169
    %v373 = vunpack.c.l.b16 %v170
    %v374 = vunpack.c.l.b16 %v171
    %v375 = vunpack.c.l.b16 %v172
    %v376 = vunpack.c.l.b16 %v173
    %v377 = vunpack.c.l.b16 %v174
    %v378 = vunpack.c.l.b16 %v175
    %v379 = vunpack.c.l.b16 %v176
    %v380 = vunpack.c.l.b16 %v177
    %v381 = vpack.c.b16 %v284, %v283
    %v382 = vpack.c.b16 %v286, %v285
    %v383 = vpack.c.b16 %v288, %v287
    %v384 = vpack.c.b16 %v290, %v289
    %v385 = vpack.c.b16 %v292, %v291
    %v386 = vpack.c.b16 %v294, %v293
    %v387 = vpack.c.b16 %v296, %v295
    %v388 = vpack.c.b16 %v298, %v297
    %v389 = vpack.c.b16 %v300, %v299
    %v390 = vpack.c.b16 %v302, %v301
    %v391 = vpack.c.b16 %v304, %v303
    %v392 = vpack.c.b16 %v306, %v305
    %v393 = vpack.c.b16 %v308, %v307
    %v394 = vpack.c.b16 %v310, %v309
    %v395 = vpack.c.b16 %v312, %v311
    %v396 = vpack.c.b16 %v314, %v313
    %v397 = vpack.c.b16 %v316, %v315
    %v398 = vpack.c.b16 %v318, %v317
    %v399 = vpack.c.b16 %v320, %v319
    %v400 = vpack.c.b16 %v322, %v321
    %v401 = vpack.c.b16 %v324, %v323
    %v402 = vpack.c.b16 %v326, %v325
    %v403 = vpack.c.b16 %v328, %v327
    %v404 = vpack.c.b16 %v330, %v329
    %v405 = vpack.c.b16 %v332, %v331
    %v406 = vpack.c.b16 %v334, %v333
    %v407 = vpack.c.b16 %v336, %v335
    %v408 = vpack.c.b16 %v338, %v337
    %v409 = vpack.c.b16 %v340, %v339
    %v410 = vpack.c.b16 %v342, %v341
    %v411 = vpack.c.b16 %v344, %v343
    %v412 = vpack.c.b16 %v346, %v345
    %v413 = vpack.c.b16 %v348, %v347
    %v414 = vpack.c.b16 %v350, %v349
    %v415 = vpack.c.b16 %v352, %v351
    %v416 = vpack.c.b16 %v354, %v353
    %v417 = vpack.c.b16 %v356, %v355
    %v418 = vpack.c.b16 %v358, %v357
    %v419 = vpack.c.b16 %v360, %v359
    %v420 = vpack.c.b16 %v362, %v361
    %v421 = vpack.c.b16 %v364, %v363
    %v422 = vpack.c.b16 %v366, %v365
    %v423 = vpack.c.b16 %v368, %v367
    %v424 = vpack.c.b16 %v370, %v369
    %v425 = vpack.c.b16 %v372, %v371
    %v426 = vpack.c.b16 %v374, %v373
    %v427 = vpack.c.b16 %v376, %v375
    %v428 = vpack.c.b16 %v378, %v377
    %v429 = vpack.c.b16 %v380, %v379
    %vm479 = vcmask 130048
    %v481 = vsel %vm479, %v79, 0
    %483 = vmatprep.subr.bf16.mxu0 0
    %484 = vmatpush1.bf16.msra.mxu0 %v381
    %485 = vmatprep.subr.bf16.mxu0 0
    %486 = vmatpush1.bf16.msra.mxu0 %v382
    %487 = vmatprep.subr.bf16.mxu0 0
    %488 = vmatpush1.bf16.msra.mxu0 %v383
    %489 = vmatprep.subr.bf16.mxu0 0
    %490 = vmatpush1.bf16.msra.mxu0 %v384
    %491 = vmatprep.subr.bf16.mxu0 0
    %492 = vmatpush1.bf16.msra.mxu0 %v385
    %493 = vmatprep.subr.bf16.mxu0 0
    %494 = vmatpush1.bf16.msra.mxu0 %v386
    %495 = vmatprep.subr.bf16.mxu0 0
    %496 = vmatpush1.bf16.msra.mxu0 %v387
    %497 = vmatprep.subr.bf16.mxu0 0
    %498 = vmatpush1.bf16.msra.mxu0 %v388
    %499 = vmatprep.subr.bf16.mxu0 0
    %500 = vmatpush1.bf16.msra.mxu0 %v389
    %501 = vmatprep.subr.bf16.mxu0 0
    %502 = vmatpush1.bf16.msra.mxu0 %v390
    %503 = vmatprep.subr.bf16.mxu0 0
    %504 = vmatpush1.bf16.msra.mxu0 %v391
    %505 = vmatprep.subr.bf16.mxu0 0
    %506 = vmatpush1.bf16.msra.mxu0 %v392
    %507 = vmatprep.subr.bf16.mxu0 0
    %508 = vmatpush1.bf16.msra.mxu0 %v393
    %509 = vmatprep.subr.bf16.mxu0 0
    %510 = vmatpush1.bf16.msra.mxu0 %v394
    %511 = vmatprep.subr.bf16.mxu0 0
    %512 = vmatpush1.bf16.msra.mxu0 %v395
    %513 = vmatprep.subr.bf16.mxu0 0
    %514 = vmatpush1.bf16.msra.mxu0 %v396
    %515 = vmatprep.mubr.bf16.mxu0 %v74
    %516 = vmatmul.mubr.bf16.gmra.mrb[0].mxu0 %v73
    %v517 = vpop.f32.mrb[0].mxu0
    %v518 = vadd.f32 %v183, %v517
    %v519 = vpop.f32.mrb[0].mxu0
    %v520 = vpop.f32.mrb[0].mxu0
    %v521 = vadd.f32 %v183, %v520
    %v522 = vpop.f32.mrb[0].mxu0
    %523 = vdwg.mxu0
    %524 = vmatprep.subr.bf16.mxu0 0
    %525 = vmatpush1.bf16.msra.mxu0 %v397
    %526 = vmatprep.subr.bf16.mxu0 0
    %527 = vmatpush1.bf16.msra.mxu0 %v398
    %528 = vmatprep.subr.bf16.mxu0 0
    %529 = vmatpush1.bf16.msra.mxu0 %v399
    %530 = vmatprep.subr.bf16.mxu0 0
    %531 = vmatpush1.bf16.msra.mxu0 %v400
    %532 = vmatprep.subr.bf16.mxu0 0
    %533 = vmatpush1.bf16.msra.mxu0 %v401
    %534 = vmatprep.subr.bf16.mxu0 0
    %535 = vmatpush1.bf16.msra.mxu0 %v402
    %536 = vmatprep.subr.bf16.mxu0 0
    %537 = vmatpush1.bf16.msra.mxu0 %v403
    %538 = vmatprep.subr.bf16.mxu0 0
    %539 = vmatpush1.bf16.msra.mxu0 %v404
    %540 = vmatprep.subr.bf16.mxu0 0
    %541 = vmatpush1.bf16.msra.mxu0 %v405
    %542 = vmatprep.subr.bf16.mxu0 0
    %543 = vmatpush1.bf16.msra.mxu0 %v406
    %544 = vmatprep.subr.bf16.mxu0 0
    %545 = vmatpush1.bf16.msra.mxu0 %v407
    %546 = vmatprep.subr.bf16.mxu0 0
    %547 = vmatpush1.bf16.msra.mxu0 %v408
    %548 = vmatprep.subr.bf16.mxu0 0
    %549 = vmatpush1.bf16.msra.mxu0 %v409
    %550 = vmatprep.subr.bf16.mxu0 0
    %551 = vmatpush1.bf16.msra.mxu0 %v410
    %552 = vmatprep.subr.bf16.mxu0 0
    %553 = vmatpush1.bf16.msra.mxu0 %v411
    %554 = vmatprep.subr.bf16.mxu0 0
    %555 = vmatpush1.bf16.msra.mxu0 %v412
    %556 = vmatprep.mubr.bf16.mxu0 %v76
    %557 = vmatmul.mubr.bf16.gmra.mrb[0].mxu0 %v75
    %v558 = vpop.f32.mrb[0].mxu0
    %v559 = vadd.f32 %v518, %v558
    %v560 = vpop.f32.mrb[0].mxu0
    %v561 = vpop.f32.mrb[0].mxu0
    %v562 = vadd.f32 %v521, %v561
    %v563 = vpop.f32.mrb[0].mxu0
    %564 = vdwg.mxu0
    %565 = vmatprep.subr.bf16.mxu0 0
    %566 = vmatpush1.bf16.msra.mxu0 %v413
    %567 = vmatprep.subr.bf16.mxu0 0
    %568 = vmatpush1.bf16.msra.mxu0 %v414
    %569 = vmatprep.subr.bf16.mxu0 0
    %570 = vmatpush1.bf16.msra.mxu0 %v415
    %571 = vmatprep.subr.bf16.mxu0 0
    %572 = vmatpush1.bf16.msra.mxu0 %v416
    %573 = vmatprep.subr.bf16.mxu0 0
    %574 = vmatpush1.bf16.msra.mxu0 %v417
    %575 = vmatprep.subr.bf16.mxu0 0
    %576 = vmatpush1.bf16.msra.mxu0 %v418
    %577 = vmatprep.subr.bf16.mxu0 0
    %578 = vmatpush1.bf16.msra.mxu0 %v419
    %579 = vmatprep.subr.bf16.mxu0 0
    %580 = vmatpush1.bf16.msra.mxu0 %v420
    %581 = vmatprep.subr.bf16.mxu0 0
    %582 = vmatpush1.bf16.msra.mxu0 %v421
    %583 = vmatprep.subr.bf16.mxu0 0
    %584 = vmatpush1.bf16.msra.mxu0 %v422
    %585 = vmatprep.subr.bf16.mxu0 0
    %586 = vmatpush1.bf16.msra.mxu0 %v423
    %587 = vmatprep.subr.bf16.mxu0 0
    %588 = vmatpush1.bf16.msra.mxu0 %v424
    %589 = vmatprep.subr.bf16.mxu0 0
    %590 = vmatpush1.bf16.msra.mxu0 %v425
    %591 = vmatprep.subr.bf16.mxu0 0
    %592 = vmatpush1.bf16.msra.mxu0 %v426
    %593 = vmatprep.subr.bf16.mxu0 0
    %594 = vmatpush1.bf16.msra.mxu0 %v427
    %595 = vmatprep.subr.bf16.mxu0 0
    %596 = vmatpush1.bf16.msra.mxu0 %v428
    %597 = vmatprep.mubr.bf16.mxu0 %v78
    %598 = vmatmul.mubr.bf16.gmra.mrb[0].mxu0 %v77
    %v599 = vpop.f32.mrb[0].mxu0
    %v600 = vadd.f32 %v559, %v599
    %v601 = vpop.f32.mrb[0].mxu0
    %v602 = vpop.f32.mrb[0].mxu0
    %v603 = vadd.f32 %v562, %v602
    %v604 = vpop.f32.mrb[0].mxu0
    %605 = vdwg.mxu0
    %606 = vmatprep.subr.bf16.mxu0 0
    %607 = vmatpush1.bf16.msra.mxu0 %v429
    %608 = vmatprep.subr.bf16.mxu0 0
    %609 = vmatpush1.bf16.msra.mxu0 0
    %610 = vmatprep.subr.bf16.mxu0 0
    %611 = vmatpush1.bf16.msra.mxu0 0
    %612 = vmatprep.subr.bf16.mxu0 0
    %613 = vmatpush1.bf16.msra.mxu0 0
    %614 = vmatprep.subr.bf16.mxu0 0
    %615 = vmatpush1.bf16.msra.mxu0 0
    %616 = vmatprep.subr.bf16.mxu0 0
    %617 = vmatpush1.bf16.msra.mxu0 0
    %618 = vmatprep.subr.bf16.mxu0 0
    %619 = vmatpush1.bf16.msra.mxu0 0
    %620 = vmatprep.subr.bf16.mxu0 0
    %621 = vmatpush1.bf16.msra.mxu0 0
    %622 = vmatprep.subr.bf16.mxu0 0
    %623 = vmatpush1.bf16.msra.mxu0 0
    %624 = vmatprep.subr.bf16.mxu0 0
    %625 = vmatpush1.bf16.msra.mxu0 0
    %626 = vmatprep.subr.bf16.mxu0 0
    %627 = vmatpush1.bf16.msra.mxu0 0
    %628 = vmatprep.subr.bf16.mxu0 0
    %629 = vmatpush1.bf16.msra.mxu0 0
    %630 = vmatprep.subr.bf16.mxu0 0
    %631 = vmatpush1.bf16.msra.mxu0 0
    %632 = vmatprep.subr.bf16.mxu0 0
    %633 = vmatpush1.bf16.msra.mxu0 0
    %634 = vmatprep.subr.bf16.mxu0 0
    %635 = vmatpush1.bf16.msra.mxu0 0
    %636 = vmatprep.subr.bf16.mxu0 0
    %637 = vmatpush1.bf16.msra.mxu0 0
    %638 = vmatprep.mubr.bf16.mxu0 0
    %639 = vmatmul.mubr.bf16.gmra.mrb[0].mxu0 %v481
    %v640 = vpop.f32.mrb[0].mxu0
    %v641 = vadd.f32 %v600, %v640
    %v642 = vpop.f32.mrb[0].mxu0
    %v643 = vpop.f32.mrb[0].mxu0
    %v644 = vadd.f32 %v603, %v643
    %v645 = vpop.f32.mrb[0].mxu0
    %646 = vdwg.mxu0
    %v647 = vmax.f32 %v641, 0.0
    %v648 = vmax.f32 %v644, 0.0
    %v649 = vpack.c.bf16 %v648, %v647
    %v650 = vld [vmem:[%s3] sm:$0xf]
    %v651 = vld [vmem:[%s3 + $0x4] sm:$0xf]
    %v652 = vld [vmem:[%s3 + $0x8] sm:$0xf]
    %v653 = vld [vmem:[%s3 + $0xc] sm:$0xf]
    %v654 = vld [vmem:[%s3 + $0x10] sm:$0xf]
    %v655 = vld [vmem:[%s3 + $0x14] sm:$0xf]
    %v656 = vld [vmem:[%s3 + $0x18] sm:$0xf]
    %v657 = vld [vmem:[%s3 + $0x1c] sm:$0xf]
    %v658 = vld [vmem:[%s3 + $0x20] sm:$0xf]
    %v659 = vld [vmem:[%s3 + $0x24] sm:$0xf]
    %v660 = vld [vmem:[%s3 + $0x28] sm:$0xf]
    %v661 = vld [vmem:[%s3 + $0x2c] sm:$0xf]
    %v662 = vld [vmem:[%s3 + $0x30] sm:$0xf]
    %v663 = vld [vmem:[%s3 + $0x34] sm:$0xf]
    %v664 = vld [vmem:[%s3 + $0x38] sm:$0xf]
    %v665 = vld [vmem:[%s3 + $0x3c] sm:$0xf]
    %v666 = vld [vmem:[%s4] sm:$0x1]
    %v668 = vlaneseq
    %v669 = vshrl.u32 %v668, 7
    %v670 = vsub.s32 0, %v669
    %v671 = vrot.slane %v666, %v670
    %v689 = vunpack.c.l.b16 %v650
    %v690 = vunpack.c.l.b16 %v651
    %v691 = vunpack.c.l.b16 %v652
    %v692 = vunpack.c.l.b16 %v653
    %v693 = vunpack.c.l.b16 %v654
    %v694 = vunpack.c.l.b16 %v655
    %v695 = vunpack.c.l.b16 %v656
    %v696 = vunpack.c.l.b16 %v657
    %v697 = vunpack.c.l.b16 %v658
    %v698 = vunpack.c.l.b16 %v659
    %v699 = vunpack.c.l.b16 %v660
    %v700 = vunpack.c.l.b16 %v661
    %v701 = vunpack.c.l.b16 %v662
    %v702 = vunpack.c.l.b16 %v663
    %v703 = vunpack.c.l.b16 %v664
    %v704 = vunpack.c.l.b16 %v665
    %v705 = vpack.c.b16 %v690, %v689
    %v706 = vpack.c.b16 %v692, %v691
    %v707 = vpack.c.b16 %v694, %v693
    %v708 = vpack.c.b16 %v696, %v695
    %v709 = vpack.c.b16 %v698, %v697
    %v710 = vpack.c.b16 %v700, %v699
    %v711 = vpack.c.b16 %v702, %v701
    %v712 = vpack.c.b16 %v704, %v703
    %721 = vmatprep.subr.bf16.mxu0 0
    %722 = vmatpush1.bf16.msra.mxu0 %v705
    %723 = vmatprep.subr.bf16.mxu0 0
    %724 = vmatpush1.bf16.msra.mxu0 %v706
    %725 = vmatprep.subr.bf16.mxu0 0
    %726 = vmatpush1.bf16.msra.mxu0 %v707
    %727 = vmatprep.subr.bf16.mxu0 0
    %728 = vmatpush1.bf16.msra.mxu0 %v708
    %729 = vmatprep.subr.bf16.mxu0 0
    %730 = vmatpush1.bf16.msra.mxu0 %v709
    %731 = vmatprep.subr.bf16.mxu0 0
    %732 = vmatpush1.bf16.msra.mxu0 %v710
    %733 = vmatprep.subr.bf16.mxu0 0
    %734 = vmatpush1.bf16.msra.mxu0 %v711
    %735 = vmatprep.subr.bf16.mxu0 0
    %736 = vmatpush1.bf16.msra.mxu0 %v712
    %737 = vmatprep.subr.bf16.mxu0 0
    %738 = vmatpush1.bf16.msra.mxu0 0
    %739 = vmatprep.subr.bf16.mxu0 0
    %740 = vmatpush1.bf16.msra.mxu0 0
    %741 = vmatprep.subr.bf16.mxu0 0
    %742 = vmatpush1.bf16.msra.mxu0 0
    %743 = vmatprep.subr.bf16.mxu0 0
    %744 = vmatpush1.bf16.msra.mxu0 0
    %745 = vmatprep.subr.bf16.mxu0 0
    %746 = vmatpush1.bf16.msra.mxu0 0
    %747 = vmatprep.subr.bf16.mxu0 0
    %748 = vmatpush1.bf16.msra.mxu0 0
    %749 = vmatprep.subr.bf16.mxu0 0
    %750 = vmatpush1.bf16.msra.mxu0 0
    %751 = vmatprep.subr.bf16.mxu0 0
    %752 = vmatpush1.bf16.msra.mxu0 0
    %753 = vmatprep.mubr.bf16.mxu0 0
    %754 = vmatmul.mubr.bf16.gmra.mrb[0].mxu0 %v649
    %v755 = vpop.f32.mrb[0].mxu0
    %v756 = vadd.f32 %v671, %v755
    %v757 = vpop.f32.mrb[0].mxu0
    %v758 = vpop.f32.mrb[0].mxu0
    %v759 = vadd.f32 %v671, %v758
    %v760 = vpop.f32.mrb[0].mxu0
    %761 = vdwg.mxu0
    %v762 = vmax.f32 %v756, 0.0
    %v763 = vmax.f32 %v759, 0.0
    %v764 = vpack.c.bf16 %v763, %v762
    %v765 = vld [vmem:[%s5] sm:$0xf]
    %v766 = vld [vmem:[%s5 + $0x4] sm:$0xf]
    %v767 = vld [vmem:[%s5 + $0x8] sm:$0xf]
    %v768 = vld [vmem:[%s5 + $0xc] sm:$0xf]
    %v769 = vld [vmem:[%s5 + $0x10] sm:$0xf]
    %v770 = vld [vmem:[%s5 + $0x14] sm:$0xf]
    %v771 = vld [vmem:[%s5 + $0x18] sm:$0xf]
    %v772 = vld [vmem:[%s5 + $0x1c] sm:$0xf]
    %v773 = vld [vmem:[%s5 + $0x20] sm:$0xf]
    %v774 = vld [vmem:[%s5 + $0x24] sm:$0xf]
    %v775 = vld [vmem:[%s5 + $0x28] sm:$0xf]
    %v776 = vld [vmem:[%s5 + $0x2c] sm:$0xf]
    %v777 = vld [vmem:[%s5 + $0x30] sm:$0xf]
    %v778 = vld [vmem:[%s5 + $0x34] sm:$0xf]
    %v779 = vld [vmem:[%s5 + $0x38] sm:$0xf]
    %v780 = vld [vmem:[%s5 + $0x3c] sm:$0xf]
    %v781 = vld [vmem:[%s6] sm:$0x1]
    %v783 = vlaneseq
    %v784 = vshrl.u32 %v783, 7
    %v785 = vsub.s32 0, %v784
    %v786 = vrot.slane %v781, %v785
    %v804 = vunpack.c.l.b16 %v765
    %v805 = vunpack.c.l.b16 %v766
    %v806 = vunpack.c.l.b16 %v767
    %v807 = vunpack.c.l.b16 %v768
    %v808 = vunpack.c.l.b16 %v769
    %v809 = vunpack.c.l.b16 %v770
    %v810 = vunpack.c.l.b16 %v771
    %v811 = vunpack.c.l.b16 %v772
    %v812 = vunpack.c.l.b16 %v773
    %v813 = vunpack.c.l.b16 %v774
    %v814 = vunpack.c.l.b16 %v775
    %v815 = vunpack.c.l.b16 %v776
    %v816 = vunpack.c.l.b16 %v777
    %v817 = vunpack.c.l.b16 %v778
    %v818 = vunpack.c.l.b16 %v779
    %v819 = vunpack.c.l.b16 %v780
    %v820 = vpack.c.b16 %v805, %v804
    %v821 = vpack.c.b16 %v807, %v806
    %v822 = vpack.c.b16 %v809, %v808
    %v823 = vpack.c.b16 %v811, %v810
    %v824 = vpack.c.b16 %v813, %v812
    %v825 = vpack.c.b16 %v815, %v814
    %v826 = vpack.c.b16 %v817, %v816
    %v827 = vpack.c.b16 %v819, %v818
    %836 = vmatprep.subr.bf16.mxu0 0
    %837 = vmatpush1.bf16.msra.mxu0 %v820
    %838 = vmatprep.subr.bf16.mxu0 0
    %839 = vmatpush1.bf16.msra.mxu0 %v821
    %840 = vmatprep.subr.bf16.mxu0 0
    %841 = vmatpush1.bf16.msra.mxu0 %v822
    %842 = vmatprep.subr.bf16.mxu0 0
    %843 = vmatpush1.bf16.msra.mxu0 %v823
    %844 = vmatprep.subr.bf16.mxu0 0
    %845 = vmatpush1.bf16.msra.mxu0 %v824
    %846 = vmatprep.subr.bf16.mxu0 0
    %847 = vmatpush1.bf16.msra.mxu0 %v825
    %848 = vmatprep.subr.bf16.mxu0 0
    %849 = vmatpush1.bf16.msra.mxu0 %v826
    %850 = vmatprep.subr.bf16.mxu0 0
    %851 = vmatpush1.bf16.msra.mxu0 %v827
    %852 = vmatprep.subr.bf16.mxu0 0
    %853 = vmatpush1.bf16.msra.mxu0 0
    %854 = vmatprep.subr.bf16.mxu0 0
    %855 = vmatpush1.bf16.msra.mxu0 0
    %856 = vmatprep.subr.bf16.mxu0 0
    %857 = vmatpush1.bf16.msra.mxu0 0
    %858 = vmatprep.subr.bf16.mxu0 0
    %859 = vmatpush1.bf16.msra.mxu0 0
    %860 = vmatprep.subr.bf16.mxu0 0
    %861 = vmatpush1.bf16.msra.mxu0 0
    %862 = vmatprep.subr.bf16.mxu0 0
    %863 = vmatpush1.bf16.msra.mxu0 0
    %864 = vmatprep.subr.bf16.mxu0 0
    %865 = vmatpush1.bf16.msra.mxu0 0
    %866 = vmatprep.subr.bf16.mxu0 0
    %867 = vmatpush1.bf16.msra.mxu0 0
    %868 = vmatprep.mubr.bf16.mxu0 0
    %869 = vmatmul.mubr.bf16.gmra.mrb[0].mxu0 %v764
    %v870 = vpop.f32.mrb[0].mxu0
    %v871 = vadd.f32 %v786, %v870
    %v872 = vpop.f32.mrb[0].mxu0
    %v873 = vpop.f32.mrb[0].mxu0
    %v874 = vadd.f32 %v786, %v873
    %v875 = vpop.f32.mrb[0].mxu0
    %876 = vdwg.mxu0
    %v877 = vmax.f32 %v871, 0.0
    %v878 = vmax.f32 %v874, 0.0
    %v879 = vpack.c.bf16 %v878, %v877
    %v880 = vld [vmem:[%s7] sm:$0xf]
    %v881 = vld [vmem:[%s7 + $0x4] sm:$0xf]
    %v882 = vld [vmem:[%s7 + $0x8] sm:$0xf]
    %v883 = vld [vmem:[%s7 + $0xc] sm:$0xf]
    %v884 = vld [vmem:[%s7 + $0x10] sm:$0xf]
    %v885 = vld [vmem:[%s7 + $0x14] sm:$0xf]
    %v886 = vld [vmem:[%s7 + $0x18] sm:$0xf]
    %v887 = vld [vmem:[%s7 + $0x1c] sm:$0xf]
    %v888 = vld [vmem:[%s7 + $0x20] sm:$0xf]
    %v889 = vld [vmem:[%s7 + $0x24] sm:$0xf]
    %v890 = vld [vmem:[%s7 + $0x28] sm:$0xf]
    %v891 = vld [vmem:[%s7 + $0x2c] sm:$0xf]
    %v892 = vld [vmem:[%s7 + $0x30] sm:$0xf]
    %v893 = vld [vmem:[%s7 + $0x34] sm:$0xf]
    %v894 = vld [vmem:[%s7 + $0x38] sm:$0xf]
    %v895 = vld [vmem:[%s7 + $0x3c] sm:$0xf]
    %v896 = vld [vmem:[#allocation4] sm:$0x1]
    %v898 = vlaneseq
    %v899 = vshrl.u32 %v898, 7
    %v900 = vsub.s32 0, %v899
    %v901 = vrot.slane %v896, %v900
    %v919 = vunpack.c.l.b16 %v880
    %v920 = vunpack.c.l.b16 %v881
    %v921 = vunpack.c.l.b16 %v882
    %v922 = vunpack.c.l.b16 %v883
    %v923 = vunpack.c.l.b16 %v884
    %v924 = vunpack.c.l.b16 %v885
    %v925 = vunpack.c.l.b16 %v886
    %v926 = vunpack.c.l.b16 %v887
    %v927 = vunpack.c.l.b16 %v888
    %v928 = vunpack.c.l.b16 %v889
    %v929 = vunpack.c.l.b16 %v890
    %v930 = vunpack.c.l.b16 %v891
    %v931 = vunpack.c.l.b16 %v892
    %v932 = vunpack.c.l.b16 %v893
    %v933 = vunpack.c.l.b16 %v894
    %v934 = vunpack.c.l.b16 %v895
    %v935 = vpack.c.b16 %v920, %v919
    %v936 = vpack.c.b16 %v922, %v921
    %v937 = vpack.c.b16 %v924, %v923
    %v938 = vpack.c.b16 %v926, %v925
    %v939 = vpack.c.b16 %v928, %v927
    %v940 = vpack.c.b16 %v930, %v929
    %v941 = vpack.c.b16 %v932, %v931
    %v942 = vpack.c.b16 %v934, %v933
    %951 = vmatprep.subr.bf16.mxu0 0
    %952 = vmatpush1.bf16.msra.mxu0 %v935
    %953 = vmatprep.subr.bf16.mxu0 0
    %954 = vmatpush1.bf16.msra.mxu0 %v936
    %955 = vmatprep.subr.bf16.mxu0 0
    %956 = vmatpush1.bf16.msra.mxu0 %v937
    %957 = vmatprep.subr.bf16.mxu0 0
    %958 = vmatpush1.bf16.msra.mxu0 %v938
    %959 = vmatprep.subr.bf16.mxu0 0
    %960 = vmatpush1.bf16.msra.mxu0 %v939
    %961 = vmatprep.subr.bf16.mxu0 0
    %962 = vmatpush1.bf16.msra.mxu0 %v940
    %963 = vmatprep.subr.bf16.mxu0 0
    %964 = vmatpush1.bf16.msra.mxu0 %v941
    %965 = vmatprep.subr.bf16.mxu0 0
    %966 = vmatpush1.bf16.msra.mxu0 %v942
    %967 = vmatprep.subr.bf16.mxu0 0
    %968 = vmatpush1.bf16.msra.mxu0 0
    %969 = vmatprep.subr.bf16.mxu0 0
    %970 = vmatpush1.bf16.msra.mxu0 0
    %971 = vmatprep.subr.bf16.mxu0 0
    %972 = vmatpush1.bf16.msra.mxu0 0
    %973 = vmatprep.subr.bf16.mxu0 0
    %974 = vmatpush1.bf16.msra.mxu0 0
    %975 = vmatprep.subr.bf16.mxu0 0
    %976 = vmatpush1.bf16.msra.mxu0 0
    %977 = vmatprep.subr.bf16.mxu0 0
    %978 = vmatpush1.bf16.msra.mxu0 0
    %979 = vmatprep.subr.bf16.mxu0 0
    %980 = vmatpush1.bf16.msra.mxu0 0
    %981 = vmatprep.subr.bf16.mxu0 0
    %982 = vmatpush1.bf16.msra.mxu0 0
    %983 = vmatprep.mubr.bf16.mxu0 0
    %984 = vmatmul.mubr.bf16.gmra.mrb[0].mxu0 %v879
    %v985 = vpop.f32.mrb[0].mxu0
    %v986 = vadd.f32 %v901, %v985
    %v987 = vpop.f32.mrb[0].mxu0
    %v988 = vpop.f32.mrb[0].mxu0
    %v989 = vadd.f32 %v901, %v988
    %v990 = vpop.f32.mrb[0].mxu0
    %991 = vdwg.mxu0
    %v992 = vpack.c.bf16 %v989, %v986
    %v994 = vunpack.c.l.b16 %v992
    %v995 = vunpack.c.h.b16 %v992
    %v996 = vpack.c.b16 %v994, %v994
    %v997 = vpack.c.b16 %v995, %v995
    %1000 = vst [vmem:[%s9] sm:$0xf] %v996
    %1001 = vst [vmem:[%s9 + $0x4] sm:$0xf] %v997
    // Predicated region
    $region46: #{feedforward_mlp.1} parent=1 // pred_check
      _
    $region47: #{feedforward_mlp.1} parent=1 // pred_check_branch
      %1003 = sbr.rel (0) target = $region49
    $region48: #{feedforward_mlp.1} parent=1 // pred_region
      _
    $region49: #{feedforward_mlp.1} parent=1 // pred_fallthru
      _
    // Predicated region
    $region50: #{feedforward_mlp.1} parent=1 // pred_check
      _
    $region51: #{feedforward_mlp.1} parent=1 // pred_check_branch
      %1005 = sbr.rel (0) target = $region53
    $region52: #{feedforward_mlp.1} parent=1 // pred_region
      _
    $region53: #{feedforward_mlp.1} parent=1 // pred_fallthru
      _
    %1006 = vsyncpa [#allocation3], 1
    %1007 = vsyncpa [#allocation5], 1

</llo_original>
